<compile_context>
chip_gen: v7x
topology: tpu7x:2x2x1
jax: 0.10.0
libtpu: 0.0.40
codegen_flags: <defaults>
</compile_context>

<pallas_src>
import functools

import jax
import jax.numpy as jnp
from jax import lax
from jax.experimental import pallas as pl
from jax.experimental.pallas import tpu as pltpu

_LANE = 128
_SUBLANE = 8
_ACC_VREGS = 24                        # cap on live f32 accumulator vregs per chunk
_VMEM_LIMIT = 48 * 1024 * 1024         # > scoped default on v5e/v6e, safe on v7x


def _round_up(x, m):
    return (x + m - 1) // m * m


def _pick_tile(dim, target):
    """Largest divisor of `dim` that is <= target (and >= 1)."""
    t = max(1, min(dim, target))
    while dim % t != 0:
        t -= 1
    return t


def _pick_cout_pad(cout):
    # Lane-dense (multiple of 128) output when padding waste is small; for tiny
    # Cout (e.g. 8) a 128-wide padded store would inflate HBM writeback 16x,
    # so pad only to the sublane granule there.
    if cout % _LANE == 0 or cout >= 96:
        return _round_up(cout, _LANE)
    return _round_up(cout, _SUBLANE)


def _pick_tn(cout_p):
    # MXU N tile: 256 fills the 2x256 MXU on v6e/v7x; 128 otherwise.
    if cout_p % 256 == 0:
        return 256
    if cout_p % _LANE == 0:
        return _LANE
    return cout_p


def _chunk_rows(total, rows_per_unit, tn):
    """Largest divisor of `total` s.t. the f32 accumulator of shape
    (divisor * rows_per_unit, tn) stays under ~_ACC_VREGS vregs."""
    lane_tiles = -(-tn // _LANE)
    max_units = max(1, (_ACC_VREGS * _SUBLANE) // max(rows_per_unit * lane_tiles, 1))
    return _pick_tile(total, max_units)


# ----------------------------------------------------------------------------
# Kernels
# ----------------------------------------------------------------------------

def _gemm_bn_relu_kernel(p_ref, w_ref, scale_ref, bias_ref, o_ref, *, tc_rows):
    """Fused im2col-GEMM + folded BatchNorm + ReLU.

    p_ref:     (TM, Kp)  bf16 im2col patches for this M tile
    w_ref:     (Kp, TN)  bf16 im2col weights for this Cout tile
    scale_ref: (1, TN)   f32 folded BN scale
    bias_ref:  (1, TN)   f32 folded conv-bias + BN bias
    o_ref:     (TM, TN)  bf16 output tile
    """
    tm = p_ref.shape[0]
    scale = scale_ref[...]
    bias = bias_ref[...]
    # Static row-chunk loop bounds the live f32 accumulator (<= ~24 vregs)
    # while keeping the grid step (and its output DMA) large.
    for c0 in range(0, tm, tc_rows):
        acc = jnp.dot(p_ref[c0:c0 + tc_rows, :], w_ref[...],
                      preferred_element_type=jnp.float32)
        y = jnp.maximum(acc * scale + bias, 0.0)
        o_ref[c0:c0 + tc_rows, :] = y.astype(o_ref.dtype)


def _direct_conv_bn_relu_kernel(x_ref, w_ref, scale_ref, bias_ref, o_ref,
                                *, kh_sz, kw_sz, toh, tc_rows):
    """Direct conv (stride 1, large Cin) + folded BatchNorm + ReLU.

    x_ref:     (Hp, Wp, Cin_p)    padded input image (bf16), batch dim squeezed
    w_ref:     (KH*KW, Cin_p, TN) conv weight taps for this Cout tile (bf16)
    scale_ref: (1, TN)            folded BN scale (f32)
    bias_ref:  (1, TN)            folded conv-bias + BN bias (f32)
    o_ref:     (TOH, OW, TN)      output tile (bf16), batch dim squeezed
    """
    ow = o_ref.shape[1]
    tn = o_ref.shape[2]
    cin_p = x_ref.shape[2]
    base = pl.multiple_of(pl.program_id(2) * toh, toh)   # first output row of tile
    scale = scale_ref[...]
    bias = bias_ref[...]

    for c0 in range(0, toh, tc_rows):        # static row chunks: acc <= ~24 vregs
        acc = jnp.zeros((tc_rows * ow, tn), jnp.float32)
        for kh in range(kh_sz):
            for kw in range(kw_sz):
                # stride == 1 on this path -> all slices are unit-stride.
                # TODO(synk): derive the kw shifts with pltpu.roll from a single
                #             per-kh row window to keep the shifts on the XLU.
                patch = x_ref[pl.ds(base + c0 + kh, tc_rows), pl.ds(kw, ow), :]
                acc = acc + jnp.dot(patch.reshape(tc_rows * ow, cin_p),
                                    w_ref[kh * kw_sz + kw],
                                    preferred_element_type=jnp.float32)
        y = jnp.maximum(acc * scale + bias, 0.0)
        o_ref[c0:c0 + tc_rows, :, :] = y.reshape(tc_rows, ow, tn).astype(o_ref.dtype)


# ----------------------------------------------------------------------------
# Wrapper
# ----------------------------------------------------------------------------

def _fold_bn(conv_bias, gamma, beta, running_mean, running_var, eps, cout_p):
    inv_std = 1.0 / jnp.sqrt(running_var.astype(jnp.float32) + eps)
    scale = gamma.astype(jnp.float32) * inv_std
    bias = (conv_bias.astype(jnp.float32) - running_mean.astype(jnp.float32)) * scale \
        + beta.astype(jnp.float32)
    pad = cout_p - scale.shape[0]
    scale = jnp.pad(scale, (0, pad)).reshape(1, cout_p)
    bias = jnp.pad(bias, (0, pad)).reshape(1, cout_p)
    return scale, bias


def _conv_gemm_path(x_nhwc, w_oihw, scale, bias, oh, ow, sh, sw, ph, pw, cout_p, tn):
    n, _, _, cin = x_nhwc.shape
    cout, _, kh_sz, kw_sz = w_oihw.shape
    kc = kh_sz * kw_sz * cin
    kc_p = _round_up(kc, _SUBLANE)

    # --- XLA glue: pad + im2col patch extraction (K-order = (kh, kw, ci)) ----
    x_pad = jnp.pad(x_nhwc, ((0, 0), (ph, ph), (pw, pw), (0, 0))).astype(jnp.bfloat16)
    cols = []
    for kh in range(kh_sz):
        for kw in range(kw_sz):
            cols.append(x_pad[:, kh:kh + (oh - 1) * sh + 1:sh,
                              kw:kw + (ow - 1) * sw + 1:sw, :])
    patches = jnp.concatenate(cols, axis=-1).reshape(n * oh * ow, kc)

    m = n * oh * ow
    tm = 512                                  # big M per step (amortize ~0.35us/step)
    m_p = _round_up(m, tm)
    patches = jnp.pad(patches, ((0, m_p - m), (0, kc_p - kc)))

    # (Cout, Cin, KH, KW) -> (KH*KW*Cin, Cout_p), order matching the patches.
    w_mat = jnp.transpose(w_oihw, (2, 3, 1, 0)).reshape(kc, cout)
    w_mat = jnp.pad(w_mat, ((0, kc_p - kc), (0, cout_p - cout))).astype(jnp.bfloat16)

    tc_rows = _chunk_rows(tm, 1, tn)
    kernel = functools.partial(_gemm_bn_relu_kernel, tc_rows=tc_rows)
    cost = pl.CostEstimate(
        flops=int(2 * m * kc * cout), transcendentals=0,
        bytes_accessed=int(m_p * kc_p * 2 + kc_p * cout_p * 2
                           + 2 * cout_p * 4 + m_p * cout_p * 2))

    out = pl.pallas_call(
        kernel,
        out_shape=jax.ShapeDtypeStruct((m_p, cout_p), jnp.bfloat16),
        grid_spec=pltpu.PrefetchScalarGridSpec(
            num_scalar_prefetch=0,
            # Cout tiles innermost: the (big) patch block's index only changes
            # with the M axis, so it stays VMEM-resident across the Cout sweep
            # and is DMA'd from HBM exactly once.
            grid=(m_p // tm, cout_p // tn),
            in_specs=[
                pl.BlockSpec((tm, kc_p), lambda i, j: (i, 0)),
                pl.BlockSpec((kc_p, tn), lambda i, j: (0, j)),
                pl.BlockSpec((1, tn), lambda i, j: (0, j)),
                pl.BlockSpec((1, tn), lambda i, j: (0, j)),
            ],
            out_specs=pl.BlockSpec((tm, tn), lambda i, j: (i, j)),
        ),
        compiler_params=pltpu.CompilerParams(
            dimension_semantics=("parallel", "parallel"),
            vmem_limit_bytes=_VMEM_LIMIT),
        cost_estimate=cost,
    )(patches, w_mat, scale, bias)

    return out[:m, :cout].reshape(n, oh, ow, cout)


def _conv_direct_path(x_nhwc, w_oihw, scale, bias, oh, ow, ph, pw, cout_p, tn):
    n, h, w, cin = x_nhwc.shape
    cout, _, kh_sz, kw_sz = w_oihw.shape
    cin_p = _round_up(cin, _SUBLANE)

    x_pad = jnp.pad(x_nhwc, ((0, 0), (ph, ph), (pw, pw), (0, cin_p - cin)))
    x_pad = x_pad.astype(jnp.bfloat16)
    hp, wp = h + 2 * ph, w + 2 * pw

    w_taps = jnp.transpose(w_oihw, (2, 3, 1, 0)).reshape(kh_sz * kw_sz, cin, cout)
    w_taps = jnp.pad(w_taps, ((0, 0), (0, cin_p - cin), (0, cout_p - cout)))
    w_taps = w_taps.astype(jnp.bfloat16)

    toh = _pick_tile(oh, max(1, 512 // max(ow, 1)))     # target toh*ow ~ 512
    tc_rows = _chunk_rows(toh, ow, tn)

    kernel = functools.partial(_direct_conv_bn_relu_kernel, kh_sz=kh_sz,
                               kw_sz=kw_sz, toh=toh, tc_rows=tc_rows)
    cost = pl.CostEstimate(
        flops=int(2 * n * oh * ow * cout * cin * kh_sz * kw_sz), transcendentals=0,
        bytes_accessed=int(n * hp * wp * cin_p * 2
                           + kh_sz * kw_sz * cin_p * cout_p * 2
                           + 2 * cout_p * 4 + n * oh * ow * cout_p * 2))

    out = pl.pallas_call(
        kernel,
        out_shape=jax.ShapeDtypeStruct((n, oh, ow, cout_p), jnp.bfloat16),
        grid_spec=pltpu.PrefetchScalarGridSpec(
            num_scalar_prefetch=0,
            # (batch, Cout tiles, OH tiles): OH innermost so the weight /
            # scale / bias blocks (index depends only on the Cout tile) stay
            # resident across the OH sweep; the padded image (index depends
            # only on batch) is DMA'd once per batch element.
            grid=(n, cout_p // tn, oh // toh),
            in_specs=[
                pl.BlockSpec((None, hp, wp, cin_p), lambda b, j, i: (b, 0, 0, 0)),
                pl.BlockSpec((kh_sz * kw_sz, cin_p, tn), lambda b, j, i: (0, 0, j)),
                pl.BlockSpec((1, tn), lambda b, j, i: (0, j)),
                pl.BlockSpec((1, tn), lambda b, j, i: (0, j)),
            ],
            out_specs=pl.BlockSpec((None, toh, ow, tn), lambda b, j, i: (b, i, 0, j)),
        ),
        compiler_params=pltpu.CompilerParams(
            # Batch is the leading parallel axis, so megacore (v7x) shards it
            # first and image residency is preserved per core.
            dimension_semantics=("parallel", "parallel", "arbitrary"),
            vmem_limit_bytes=_VMEM_LIMIT),
        cost_estimate=cost,
    )(x_pad, w_taps, scale, bias)

    return out[..., :cout]


def conv_block_forward(x_nchw, w_oihw, conv_bias, gamma, beta,
                       running_mean, running_var, *, stride, padding, eps=1e-5):
    """ConvBlock forward (inference-mode BatchNorm). NCHW in / NCHW f32 out."""
    n, cin, h, w = x_nchw.shape
    cout, _, kh_sz, kw_sz = w_oihw.shape
    sh = sw = int(stride)
    ph = pw = int(padding)
    oh = (h + 2 * ph - kh_sz) // sh + 1
    ow = (w + 2 * pw - kw_sz) // sw + 1

    cout_p = _pick_cout_pad(cout)
    tn = _pick_tn(cout_p)
    cin_p = _round_up(cin, _SUBLANE)

    x_nhwc = jnp.transpose(x_nchw, (0, 2, 3, 1))
    scale, bias = _fold_bn(conv_bias, gamma, beta, running_mean, running_var,
                           eps, cout_p)

    # Small-Cin (poor per-tap MXU K-fill) and strided convs run as a fused
    # im2col-GEMM (K = KH*KW*Cin, no shifted/strided in-kernel loads);
    # large-Cin stride-1 convs run the direct per-tap kernel on the resident
    # image (avoids the KH*KW-fold im2col HBM expansion when Cin is big).
    use_gemm = (sh > 1) or (sw > 1) or (kh_sz * kw_sz * cin_p <= 512)
    if use_gemm:
        out_nhwc = _conv_gemm_path(x_nhwc, w_oihw, scale, bias,
                                   oh, ow, sh, sw, ph, pw, cout_p, tn)
    else:
        out_nhwc = _conv_direct_path(x_nhwc, w_oihw, scale, bias,
                                     oh, ow, ph, pw, cout_p, tn)

    # Kernel stores bf16 (halves HBM writeback); cast back to f32 to match the
    # PyTorch module's dtype in the same pass as the final transpose.
    return jnp.transpose(out_nhwc, (0, 3, 1, 2)).astype(jnp.float32)


# ----------------------------------------------------------------------------
# Reference + test
# ----------------------------------------------------------------------------

def _reference(x_nchw, w_oihw, conv_bias, gamma, beta,
               running_mean, running_var, *, stride, padding, eps=1e-5):
    y = lax.conv_general_dilated(
        x_nchw.astype(jnp.float32), w_oihw.astype(jnp.float32),
        window_strides=(stride, stride),
        padding=((padding, padding), (padding, padding)),
        dimension_numbers=("NCHW", "OIHW", "NCHW"),
        precision=lax.Precision.HIGHEST)
    y = y + conv_bias[None, :, None, None]
    inv_std = 1.0 / jnp.sqrt(running_var + eps)
    y = (y - running_mean[None, :, None, None]) * (gamma * inv_std)[None, :, None, None]
    y = y + beta[None, :, None, None]
    return jnp.maximum(y, 0.0)


def _make_params(key, cin, cout, k):
    kx, kw_, kb, kg, kbt = jax.random.split(key, 5)
    fan_in = cin * k * k
    bound = 1.0 / jnp.sqrt(jnp.float32(fan_in))
    w_oihw = jax.random.uniform(kw_, (cout, cin, k, k), jnp.float32, -bound, bound)
    conv_bias = jax.random.uniform(kb, (cout,), jnp.float32, -bound, bound)
    gamma = jax.random.uniform(kg, (cout,), jnp.float32, 0.5, 1.5)
    beta = jax.random.uniform(kbt, (cout,), jnp.float32, -0.5, 0.5)
    running_mean = jnp.zeros((cout,), jnp.float32)   # BatchNorm2d init defaults
    running_var = jnp.ones((cout,), jnp.float32)
    return kx, w_oihw, conv_bias, gamma, beta, running_mean, running_var


def _run_case(key, n, cin, h, w, cout, k, stride, padding):
    kx, w_oihw, conv_bias, gamma, beta, r_mean, r_var = _make_params(key, cin, cout, k)
    x = jax.random.normal(kx, (n, cin, h, w), jnp.float32)

    fwd = jax.jit(functools.partial(conv_block_forward, stride=stride, padding=padding))
    out = jax.block_until_ready(fwd(x, w_oihw, conv_bias, gamma, beta, r_mean, r_var))

    # Kernel uses bf16 MXU inputs and bf16 output storage (f32 accumulate), so
    # compare against a reference on the same bf16-rounded inputs with a
    # bf16-level tolerance.
    x_r = x.astype(jnp.bfloat16).astype(jnp.float32)
    w_r = w_oihw.astype(jnp.bfloat16).astype(jnp.float32)
    ref = _reference(x_r, w_r, conv_bias, gamma, beta, r_mean, r_var,
                     stride=stride, padding=padding)
    oh = (h + 2 * padding - k) // stride + 1
    ow_ = (w + 2 * padding - k) // stride + 1
    assert out.shape == (n, cout, oh, ow_), out.shape
    err = float(jnp.max(jnp.abs(out - ref)))
    assert err < 3e-2, err


if __name__ == "__main__":
    key = jax.random.PRNGKey(0)
    k1, k2 = jax.random.split(key)
    # Small-Cin config (module-consistent shapes): fused im2col-GEMM path.
    _run_case(k1, n=2, cin=4, h=16, w=16, cout=8, k=3, stride=1, padding=1)
    # Larger-Cin config: direct per-tap path (resident image, K = Cin per tap).
    _run_case(k2, n=1, cin=64, h=8, w=8, cout=32, k=3, stride=1, padding=1)
    print("KERNEL_OK")
</pallas_src>

<mosaic_0001>
module attributes {stable_mosaic.version = 11 : i64} {
  func.func @_gemm_bn_relu_kernel(%arg0: i32, %arg1: i32, %arg2: memref<512x40xbf16, #tpu.memory_space<vmem>>, %arg3: memref<40x8xbf16, #tpu.memory_space<vmem>>, %arg4: memref<1x8xf32, #tpu.memory_space<vmem>>, %arg5: memref<1x8xf32, #tpu.memory_space<vmem>>, %arg6: memref<512x8xbf16, #tpu.memory_space<vmem>>) attributes {dimension_semantics = [#tpu.dimension_semantics<parallel>, #tpu.dimension_semantics<parallel>], iteration_bounds = array<i64: 1, 1>, scalar_prefetch = 0 : i64, scratch_operands = 0 : i64, tpu.core_type = #tpu.core_type<tc>, window_params = [{transform_indices = @transform_0, window_bounds = array<i64: 512, 40>}, {transform_indices = @transform_1, window_bounds = array<i64: 40, 8>}, {transform_indices = @transform_2, window_bounds = array<i64: 1, 8>}, {transform_indices = @transform_3, window_bounds = array<i64: 1, 8>}, {transform_indices = @transform_4, window_bounds = array<i64: 512, 8>}]} {
    %c0 = arith.constant 0 : index
    %c0_0 = arith.constant 0 : index
    %0 = vector.load %arg4[%c0, %c0_0] : memref<1x8xf32, #tpu.memory_space<vmem>>, vector<1x8xf32>
    %c0_1 = arith.constant 0 : index
    %c0_2 = arith.constant 0 : index
    %1 = vector.load %arg5[%c0_1, %c0_2] : memref<1x8xf32, #tpu.memory_space<vmem>>, vector<1x8xf32>
    %c0_3 = arith.constant 0 : index
    %c0_4 = arith.constant 0 : index
    %2 = vector.load %arg2[%c0_3, %c0_4] : memref<512x40xbf16, #tpu.memory_space<vmem>>, vector<128x40xbf16>
    %c0_5 = arith.constant 0 : index
    %c0_6 = arith.constant 0 : index
    %3 = vector.load %arg3[%c0_5, %c0_6] : memref<40x8xbf16, #tpu.memory_space<vmem>>, vector<40x8xbf16>
    %cst = arith.constant dense<0.000000e+00> : vector<128x8xf32>
    %4 = tpu.matmul %2, %3, %cst {dimension_numbers = #tpu.dot_dimension_numbers<[1], [0], [0], [1], [0, 0, 1, 1], [], []>} : vector<128x40xbf16>, vector<40x8xbf16>, vector<128x8xf32> -> vector<128x8xf32>
    %5 = vector.broadcast %0 : vector<1x8xf32> to vector<128x8xf32>
    %6 = arith.mulf %4, %5 : vector<128x8xf32>
    %7 = vector.broadcast %1 : vector<1x8xf32> to vector<128x8xf32>
    %8 = arith.addf %6, %7 : vector<128x8xf32>
    %cst_7 = arith.constant 0.000000e+00 : f32
    %9 = vector.broadcast %cst_7 : f32 to vector<128x8xf32>
    %10 = arith.maximumf %8, %9 : vector<128x8xf32>
    %11 = arith.truncf %10 : vector<128x8xf32> to vector<128x8xbf16>
    %c0_8 = arith.constant 0 : index
    %c0_9 = arith.constant 0 : index
    %12 = vector.load %arg6[%c0_8, %c0_9] : memref<512x8xbf16, #tpu.memory_space<vmem>>, vector<128x8xbf16>
    tpu.vector_store %arg6[%c0_8, %c0_9], %11 {strides = array<i32>} : memref<512x8xbf16, #tpu.memory_space<vmem>>, vector<128x8xbf16>,
    %c128 = arith.constant 128 : index
    %c0_10 = arith.constant 0 : index
    %13 = vector.load %arg2[%c128, %c0_10] : memref<512x40xbf16, #tpu.memory_space<vmem>>, vector<128x40xbf16>
    %c0_11 = arith.constant 0 : index
    %c0_12 = arith.constant 0 : index
    %14 = vector.load %arg3[%c0_11, %c0_12] : memref<40x8xbf16, #tpu.memory_space<vmem>>, vector<40x8xbf16>
    %cst_13 = arith.constant dense<0.000000e+00> : vector<128x8xf32>
    %15 = tpu.matmul %13, %14, %cst_13 {dimension_numbers = #tpu.dot_dimension_numbers<[1], [0], [0], [1], [0, 0, 1, 1], [], []>} : vector<128x40xbf16>, vector<40x8xbf16>, vector<128x8xf32> -> vector<128x8xf32>
    %16 = vector.broadcast %0 : vector<1x8xf32> to vector<128x8xf32>
    %17 = arith.mulf %15, %16 : vector<128x8xf32>
    %18 = vector.broadcast %1 : vector<1x8xf32> to vector<128x8xf32>
    %19 = arith.addf %17, %18 : vector<128x8xf32>
    %cst_14 = arith.constant 0.000000e+00 : f32
    %20 = vector.broadcast %cst_14 : f32 to vector<128x8xf32>
    %21 = arith.maximumf %19, %20 : vector<128x8xf32>
    %22 = arith.truncf %21 : vector<128x8xf32> to vector<128x8xbf16>
    %c128_15 = arith.constant 128 : index
    %c0_16 = arith.constant 0 : index
    %23 = vector.load %arg6[%c128_15, %c0_16] : memref<512x8xbf16, #tpu.memory_space<vmem>>, vector<128x8xbf16>
    tpu.vector_store %arg6[%c128_15, %c0_16], %22 {strides = array<i32>} : memref<512x8xbf16, #tpu.memory_space<vmem>>, vector<128x8xbf16>,
    %c256 = arith.constant 256 : index
    %c0_17 = arith.constant 0 : index
    %24 = vector.load %arg2[%c256, %c0_17] : memref<512x40xbf16, #tpu.memory_space<vmem>>, vector<128x40xbf16>
    %c0_18 = arith.constant 0 : index
    %c0_19 = arith.constant 0 : index
    %25 = vector.load %arg3[%c0_18, %c0_19] : memref<40x8xbf16, #tpu.memory_space<vmem>>, vector<40x8xbf16>
    %cst_20 = arith.constant dense<0.000000e+00> : vector<128x8xf32>
    %26 = tpu.matmul %24, %25, %cst_20 {dimension_numbers = #tpu.dot_dimension_numbers<[1], [0], [0], [1], [0, 0, 1, 1], [], []>} : vector<128x40xbf16>, vector<40x8xbf16>, vector<128x8xf32> -> vector<128x8xf32>
    %27 = vector.broadcast %0 : vector<1x8xf32> to vector<128x8xf32>
    %28 = arith.mulf %26, %27 : vector<128x8xf32>
    %29 = vector.broadcast %1 : vector<1x8xf32> to vector<128x8xf32>
    %30 = arith.addf %28, %29 : vector<128x8xf32>
    %cst_21 = arith.constant 0.000000e+00 : f32
    %31 = vector.broadcast %cst_21 : f32 to vector<128x8xf32>
    %32 = arith.maximumf %30, %31 : vector<128x8xf32>
    %33 = arith.truncf %32 : vector<128x8xf32> to vector<128x8xbf16>
    %c256_22 = arith.constant 256 : index
    %c0_23 = arith.constant 0 : index
    %34 = vector.load %arg6[%c256_22, %c0_23] : memref<512x8xbf16, #tpu.memory_space<vmem>>, vector<128x8xbf16>
    tpu.vector_store %arg6[%c256_22, %c0_23], %33 {strides = array<i32>} : memref<512x8xbf16, #tpu.memory_space<vmem>>, vector<128x8xbf16>,
    %c384 = arith.constant 384 : index
    %c0_24 = arith.constant 0 : index
    %35 = vector.load %arg2[%c384, %c0_24] : memref<512x40xbf16, #tpu.memory_space<vmem>>, vector<128x40xbf16>
    %c0_25 = arith.constant 0 : index
    %c0_26 = arith.constant 0 : index
    %36 = vector.load %arg3[%c0_25, %c0_26] : memref<40x8xbf16, #tpu.memory_space<vmem>>, vector<40x8xbf16>
    %cst_27 = arith.constant dense<0.000000e+00> : vector<128x8xf32>
    %37 = tpu.matmul %35, %36, %cst_27 {dimension_numbers = #tpu.dot_dimension_numbers<[1], [0], [0], [1], [0, 0, 1, 1], [], []>} : vector<128x40xbf16>, vector<40x8xbf16>, vector<128x8xf32> -> vector<128x8xf32>
    %38 = vector.broadcast %0 : vector<1x8xf32> to vector<128x8xf32>
    %39 = arith.mulf %37, %38 : vector<128x8xf32>
    %40 = vector.broadcast %1 : vector<1x8xf32> to vector<128x8xf32>
    %41 = arith.addf %39, %40 : vector<128x8xf32>
    %cst_28 = arith.constant 0.000000e+00 : f32
    %42 = vector.broadcast %cst_28 : f32 to vector<128x8xf32>
    %43 = arith.maximumf %41, %42 : vector<128x8xf32>
    %44 = arith.truncf %43 : vector<128x8xf32> to vector<128x8xbf16>
    %c384_29 = arith.constant 384 : index
    %c0_30 = arith.constant 0 : index
    %45 = vector.load %arg6[%c384_29, %c0_30] : memref<512x8xbf16, #tpu.memory_space<vmem>>, vector<128x8xbf16>
    tpu.vector_store %arg6[%c384_29, %c0_30], %44 {strides = array<i32>} : memref<512x8xbf16, #tpu.memory_space<vmem>>, vector<128x8xbf16>,
    return
  }
  func.func @transform_0(%arg0: i32, %arg1: i32) -> (i32, i32) {
    %c0_i32 = arith.constant 0 : i32
    %c0_i32_0 = arith.constant 0 : i32
    return %arg0, %c0_i32 : i32, i32
  }
  func.func @transform_1(%arg0: i32, %arg1: i32) -> (i32, i32) {
    %c0_i32 = arith.constant 0 : i32
    %c0_i32_0 = arith.constant 0 : i32
    return %c0_i32, %arg1 : i32, i32
  }
  func.func @transform_2(%arg0: i32, %arg1: i32) -> (i32, i32) {
    %c0_i32 = arith.constant 0 : i32
    %c0_i32_0 = arith.constant 0 : i32
    return %c0_i32, %arg1 : i32, i32
  }
  func.func @transform_3(%arg0: i32, %arg1: i32) -> (i32, i32) {
    %c0_i32 = arith.constant 0 : i32
    %c0_i32_0 = arith.constant 0 : i32
    return %c0_i32, %arg1 : i32, i32
  }
  func.func @transform_4(%arg0: i32, %arg1: i32) -> (i32, i32) {
    %c0_i32 = arith.constant 0 : i32
    return %arg0, %arg1 : i32, i32
  }
}

</mosaic_0001>

<llo_original>
// kernel: conv_block_forward.1
$region0: #{conv_block_forward.1}
  #allocation0 [shape = 'u32[]', space=smem, size = 0x4, offset = 0x4, fixed_abs, tag = 'smem constant byte address 0x4 - core index']
  #allocation1 [shape = 'u32[144,128]{1,0:T(1,128)}', space=vmem, size = 0x12000, scoped, tag = 'internal scratch']
  %s0 = inlined_call_operand.vmem [shape: bf16[512,40], index: 0, kind: input, shape index: {}]
  %s1 = inlined_call_operand.vmem [shape: bf16[40,8], index: 1, kind: input, shape index: {}]
  %s2 = inlined_call_operand.vmem [shape: f32[1,8], index: 2, kind: input, shape index: {}]
  %s3 = inlined_call_operand.vmem [shape: f32[1,8], index: 3, kind: input, shape index: {}]
  %s4 = inlined_call_operand.vmem [shape: bf16[512,8], index: 4, kind: output, shape index: {}]
  %s5 = sld [smem:[#allocation0]]
  $region26: #{conv_block_forward.1} parent=0
    _
  %s7 = ssub.s32 1, %s5
  %s8 = scalar_select 0, %s7, %s5
  // Predicated region
  $region2: #{conv_block_forward.1} parent=0 // pred_check
    _
  $region3: #{conv_block_forward.1} parent=0 // pred_check_branch
    %10 = sbr.rel (0) target = $region5
  $region4: #{conv_block_forward.1} parent=0 // pred_region
    _
  $region5: #{conv_block_forward.1} parent=0 // pred_fallthru
    _
  // Predicated region
  $region6: #{conv_block_forward.1} parent=0 // pred_check
    _
  $region7: #{conv_block_forward.1} parent=0 // pred_check_branch
    %12 = sbr.rel (0) target = $region9
  $region8: #{conv_block_forward.1} parent=0 // pred_region
    _
  $region9: #{conv_block_forward.1} parent=0 // pred_fallthru
    _
  // Predicated region
  $region10: #{conv_block_forward.1} parent=0 // pred_check
    _
  $region11: #{conv_block_forward.1} parent=0 // pred_check_branch
    %14 = sbr.rel (0) target = $region13
  $region12: #{conv_block_forward.1} parent=0 // pred_region
    _
  $region13: #{conv_block_forward.1} parent=0 // pred_fallthru
    _
  // Predicated region
  $region14: #{conv_block_forward.1} parent=0 // pred_check
    _
  $region15: #{conv_block_forward.1} parent=0 // pred_check_branch
    %16 = sbr.rel (0) target = $region17
  $region16: #{conv_block_forward.1} parent=0 // pred_region
    _
  $region17: #{conv_block_forward.1} parent=0 // pred_fallthru
    _
  %v18 = vld [vmem:[%s2] sm:$0x1]
  %v19 = vld [vmem:[%s3] sm:$0x1]
  %v20 = vld [vmem:[%s0] sm:$0xf]
  %v21 = vld [vmem:[%s0 + $0x4] sm:$0xf]
  %v22 = vld [vmem:[%s0 + $0x8] sm:$0xf]
  %v23 = vld [vmem:[%s0 + $0xc] sm:$0xf]
  %v24 = vld [vmem:[%s0 + $0x10] sm:$0xf]
  %v25 = vld [vmem:[%s0 + $0x14] sm:$0xf]
  %v26 = vld [vmem:[%s0 + $0x18] sm:$0xf]
  %v27 = vld [vmem:[%s0 + $0x1c] sm:$0xf]
  %v28 = vld [vmem:[%s0 + $0x20] sm:$0xf]
  %v29 = vld [vmem:[%s0 + $0x24] sm:$0xf]
  %v30 = vld [vmem:[%s0 + $0x28] sm:$0xf]
  %v31 = vld [vmem:[%s0 + $0x2c] sm:$0xf]
  %v32 = vld [vmem:[%s0 + $0x30] sm:$0xf]
  %v33 = vld [vmem:[%s0 + $0x34] sm:$0xf]
  %v34 = vld [vmem:[%s0 + $0x38] sm:$0xf]
  %v35 = vld [vmem:[%s0 + $0x3c] sm:$0xf]
  %v36 = vld [vmem:[%s1] sm:$0xf]
  %v37 = vld [vmem:[%s1 + $0x4] sm:$0xf]
  %v38 = vld [vmem:[%s1 + $0x8] sm:$0xf]
  %v39 = vld [vmem:[%s1 + $0xc] sm:$0xf]
  %v40 = vld [vmem:[%s1 + $0x10] sm:$0xf]
  %v57 = vunpack.c.l.b16 %v20
  %v58 = vunpack.c.l.b16 %v21
  %v59 = vunpack.c.l.b16 %v22
  %v60 = vunpack.c.l.b16 %v23
  %v61 = vunpack.c.l.b16 %v24
  %v62 = vunpack.c.l.b16 %v25
  %v63 = vunpack.c.l.b16 %v26
  %v64 = vunpack.c.l.b16 %v27
  %v65 = vunpack.c.l.b16 %v28
  %v66 = vunpack.c.l.b16 %v29
  %v67 = vunpack.c.l.b16 %v30
  %v68 = vunpack.c.l.b16 %v31
  %v69 = vunpack.c.l.b16 %v32
  %v70 = vunpack.c.l.b16 %v33
  %v71 = vunpack.c.l.b16 %v34
  %v72 = vunpack.c.l.b16 %v35
  %v73 = vpack.c.b16 %v58, %v57
  %v74 = vpack.c.b16 %v60, %v59
  %v75 = vpack.c.b16 %v62, %v61
  %v76 = vpack.c.b16 %v64, %v63
  %v77 = vpack.c.b16 %v66, %v65
  %v78 = vpack.c.b16 %v68, %v67
  %v79 = vpack.c.b16 %v70, %v69
  %v80 = vpack.c.b16 %v72, %v71
  %v86 = vunpack.c.l.b16 %v36
  %v87 = vunpack.c.l.b16 %v37
  %v88 = vunpack.c.l.b16 %v38
  %v89 = vunpack.c.l.b16 %v39
  %v90 = vunpack.c.l.b16 %v40
  %v91 = vpack.c.b16 %v87, %v86
  %v92 = vpack.c.b16 %v89, %v88
  %v93 = vpack.c.b16 %v90, %v90
  %vm96 = vcmask 326656
  %v98 = vsel %vm96, %v73, 0
  %v101 = vsel %vm96, %v74, 0
  %v104 = vsel %vm96, %v75, 0
  %v107 = vsel %vm96, %v76, 0
  %v110 = vsel %vm96, %v77, 0
  %v113 = vsel %vm96, %v78, 0
  %v116 = vsel %vm96, %v79, 0
  %v119 = vsel %vm96, %v80, 0
  %vm121 = vcmask 1043456
  %v123 = vsel %vm121, %v93, 0
  %125 = vmatprep.subr.bf16.mxu0 0
  %126 = vmatpush1.bf16.msra.mxu0 %v91
  %127 = vmatprep.subr.bf16.mxu0 0
  %128 = vmatpush1.bf16.msra.mxu0 %v92
  %129 = vmatprep.subr.bf16.mxu0 0
  %130 = vmatpush1.bf16.msra.mxu0 %v123
  %131 = vmatprep.subr.bf16.mxu0 0
  %132 = vmatpush1.bf16.msra.mxu0 0
  %133 = vmatprep.subr.bf16.mxu0 0
  %134 = vmatpush1.bf16.msra.mxu0 0
  %135 = vmatprep.subr.bf16.mxu0 0
  %136 = vmatpush1.bf16.msra.mxu0 0
  %137 = vmatprep.subr.bf16.mxu0 0
  %138 = vmatpush1.bf16.msra.mxu0 0
  %139 = vmatprep.subr.bf16.mxu0 0
  %140 = vmatpush1.bf16.msra.mxu0 0
  %141 = vmatprep.subr.bf16.mxu0 0
  %142 = vmatpush1.bf16.msra.mxu0 0
  %143 = vmatprep.subr.bf16.mxu0 0
  %144 = vmatpush1.bf16.msra.mxu0 0
  %145 = vmatprep.subr.bf16.mxu0 0
  %146 = vmatpush1.bf16.msra.mxu0 0
  %147 = vmatprep.subr.bf16.mxu0 0
  %148 = vmatpush1.bf16.msra.mxu0 0
  %149 = vmatprep.subr.bf16.mxu0 0
  %150 = vmatpush1.bf16.msra.mxu0 0
  %151 = vmatprep.subr.bf16.mxu0 0
  %152 = vmatpush1.bf16.msra.mxu0 0
  %153 = vmatprep.subr.bf16.mxu0 0
  %154 = vmatpush1.bf16.msra.mxu0 0
  %155 = vmatprep.subr.bf16.mxu0 0
  %156 = vmatpush1.bf16.msra.mxu0 0
  %157 = vmatprep.mubr.bf16.mxu0 0
  %158 = vmatmul.mubr.bf16.gmra.mrb[0].mxu0 %v98
  %v159 = vpop.f32.mrb[0].mxu0
  %v160 = vadd.f32 0.0, %v159
  %v161 = vpop.f32.mrb[0].mxu0
  %v162 = vpop.f32.mrb[0].mxu0
  %v163 = vadd.f32 0.0, %v162
  %v164 = vpop.f32.mrb[0].mxu0
  %165 = vmatprep.mubr.bf16.mxu0 0
  %166 = vmatmul.mubr.bf16.gmra.mrb[0].mxu0 %v101
  %v167 = vpop.f32.mrb[0].mxu0
  %v168 = vadd.f32 0.0, %v167
  %v169 = vpop.f32.mrb[0].mxu0
  %v170 = vpop.f32.mrb[0].mxu0
  %v171 = vadd.f32 0.0, %v170
  %v172 = vpop.f32.mrb[0].mxu0
  %173 = vmatprep.mubr.bf16.mxu0 0
  %174 = vmatmul.mubr.bf16.gmra.mrb[0].mxu0 %v104
  %v175 = vpop.f32.mrb[0].mxu0
  %v176 = vadd.f32 0.0, %v175
  %v177 = vpop.f32.mrb[0].mxu0
  %v178 = vpop.f32.mrb[0].mxu0
  %v179 = vadd.f32 0.0, %v178
  %v180 = vpop.f32.mrb[0].mxu0
  %181 = vmatprep.mubr.bf16.mxu0 0
  %182 = vmatmul.mubr.bf16.gmra.mrb[0].mxu0 %v107
  %v183 = vpop.f32.mrb[0].mxu0
  %v184 = vadd.f32 0.0, %v183
  %v185 = vpop.f32.mrb[0].mxu0
  %v186 = vpop.f32.mrb[0].mxu0
  %v187 = vadd.f32 0.0, %v186
  %v188 = vpop.f32.mrb[0].mxu0
  %189 = vmatprep.mubr.bf16.mxu0 0
  %190 = vmatmul.mubr.bf16.gmra.mrb[0].mxu0 %v110
  %v191 = vpop.f32.mrb[0].mxu0
  %v192 = vadd.f32 0.0, %v191
  %v193 = vpop.f32.mrb[0].mxu0
  %v194 = vpop.f32.mrb[0].mxu0
  %v195 = vadd.f32 0.0, %v194
  %v196 = vpop.f32.mrb[0].mxu0
  %197 = vmatprep.mubr.bf16.mxu0 0
  %198 = vmatmul.mubr.bf16.gmra.mrb[0].mxu0 %v113
  %v199 = vpop.f32.mrb[0].mxu0
  %v200 = vadd.f32 0.0, %v199
  %v201 = vpop.f32.mrb[0].mxu0
  %v202 = vpop.f32.mrb[0].mxu0
  %v203 = vadd.f32 0.0, %v202
  %v204 = vpop.f32.mrb[0].mxu0
  %205 = vmatprep.mubr.bf16.mxu0 0
  %206 = vmatmul.mubr.bf16.gmra.mrb[0].mxu0 %v116
  %v207 = vpop.f32.mrb[0].mxu0
  %v208 = vadd.f32 0.0, %v207
  %v209 = vpop.f32.mrb[0].mxu0
  %v210 = vpop.f32.mrb[0].mxu0
  %v211 = vadd.f32 0.0, %v210
  %v212 = vpop.f32.mrb[0].mxu0
  %213 = vmatprep.mubr.bf16.mxu0 0
  %214 = vmatmul.mubr.bf16.gmra.mrb[0].mxu0 %v119
  %v215 = vpop.f32.mrb[0].mxu0
  %v216 = vadd.f32 0.0, %v215
  %v217 = vpop.f32.mrb[0].mxu0
  %v218 = vpop.f32.mrb[0].mxu0
  %v219 = vadd.f32 0.0, %v218
  %v220 = vpop.f32.mrb[0].mxu0
  %221 = vdwg.mxu0
  %v223 = vlaneseq
  %v224 = vshrl.u32 %v223, 7
  %v225 = vsub.s32 0, %v224
  %v226 = vrot.slane %v18, %v225
  %v228 = vmul.f32 %v160, %v226
  %v229 = vmul.f32 %v163, %v226
  %v230 = vmul.f32 %v168, %v226
  %v231 = vmul.f32 %v171, %v226
  %v232 = vmul.f32 %v176, %v226
  %v233 = vmul.f32 %v179, %v226
  %v234 = vmul.f32 %v184, %v226
  %v235 = vmul.f32 %v187, %v226
  %v236 = vmul.f32 %v192, %v226
  %v237 = vmul.f32 %v195, %v226
  %v238 = vmul.f32 %v200, %v226
  %v239 = vmul.f32 %v203, %v226
  %v240 = vmul.f32 %v208, %v226
  %v241 = vmul.f32 %v211, %v226
  %v242 = vmul.f32 %v216, %v226
  %v243 = vmul.f32 %v219, %v226
  %v245 = vlaneseq
  %v246 = vshrl.u32 %v245, 7
  %v247 = vsub.s32 0, %v246
  %v248 = vrot.slane %v19, %v247
  %v250 = vadd.f32 %v228, %v248
  %v251 = vadd.f32 %v229, %v248
  %v252 = vadd.f32 %v230, %v248
  %v253 = vadd.f32 %v231, %v248
  %v254 = vadd.f32 %v232, %v248
  %v255 = vadd.f32 %v233, %v248
  %v256 = vadd.f32 %v234, %v248
  %v257 = vadd.f32 %v235, %v248
  %v258 = vadd.f32 %v236, %v248
  %v259 = vadd.f32 %v237, %v248
  %v260 = vadd.f32 %v238, %v248
  %v261 = vadd.f32 %v239, %v248
  %v262 = vadd.f32 %v240, %v248
  %v263 = vadd.f32 %v241, %v248
  %v264 = vadd.f32 %v242, %v248
  %v265 = vadd.f32 %v243, %v248
  %v266 = vmax.f32 %v250, 0.0
  %v267 = vmax.f32 %v251, 0.0
  %v268 = vmax.f32 %v252, 0.0
  %v269 = vmax.f32 %v253, 0.0
  %v270 = vmax.f32 %v254, 0.0
  %v271 = vmax.f32 %v255, 0.0
  %v272 = vmax.f32 %v256, 0.0
  %v273 = vmax.f32 %v257, 0.0
  %v274 = vmax.f32 %v258, 0.0
  %v275 = vmax.f32 %v259, 0.0
  %v276 = vmax.f32 %v260, 0.0
  %v277 = vmax.f32 %v261, 0.0
  %v278 = vmax.f32 %v262, 0.0
  %v279 = vmax.f32 %v263, 0.0
  %v280 = vmax.f32 %v264, 0.0
  %v281 = vmax.f32 %v265, 0.0
  %v282 = vpack.c.bf16 %v267, %v266
  %v283 = vpack.c.bf16 %v269, %v268
  %v284 = vpack.c.bf16 %v271, %v270
  %v285 = vpack.c.bf16 %v273, %v272
  %v286 = vpack.c.bf16 %v275, %v274
  %v287 = vpack.c.bf16 %v277, %v276
  %v288 = vpack.c.bf16 %v279, %v278
  %v289 = vpack.c.bf16 %v281, %v280
  %v298 = vunpack.c.l.b16 %v282
  %v299 = vunpack.c.h.b16 %v282
  %v300 = vunpack.c.l.b16 %v283
  %v301 = vunpack.c.h.b16 %v283
  %v302 = vunpack.c.l.b16 %v284
  %v303 = vunpack.c.h.b16 %v284
  %v304 = vunpack.c.l.b16 %v285
  %v305 = vunpack.c.h.b16 %v285
  %v306 = vunpack.c.l.b16 %v286
  %v307 = vunpack.c.h.b16 %v286
  %v308 = vunpack.c.l.b16 %v287
  %v309 = vunpack.c.h.b16 %v287
  %v310 = vunpack.c.l.b16 %v288
  %v311 = vunpack.c.h.b16 %v288
  %v312 = vunpack.c.l.b16 %v289
  %v313 = vunpack.c.h.b16 %v289
  %v314 = vpack.c.b16 %v298, %v298
  %v315 = vpack.c.b16 %v299, %v299
  %v316 = vpack.c.b16 %v300, %v300
  %v317 = vpack.c.b16 %v301, %v301
  %v318 = vpack.c.b16 %v302, %v302
  %v319 = vpack.c.b16 %v303, %v303
  %v320 = vpack.c.b16 %v304, %v304
  %v321 = vpack.c.b16 %v305, %v305
  %v322 = vpack.c.b16 %v306, %v306
  %v323 = vpack.c.b16 %v307, %v307
  %v324 = vpack.c.b16 %v308, %v308
  %v325 = vpack.c.b16 %v309, %v309
  %v326 = vpack.c.b16 %v310, %v310
  %v327 = vpack.c.b16 %v311, %v311
  %v328 = vpack.c.b16 %v312, %v312
  %v329 = vpack.c.b16 %v313, %v313
  %vm346 = vcmask 60416
  %347 = vst.msk [vmem:[%s4] sm:$0xf] %vm346, %v314
  %348 = vst.msk [vmem:[%s4 + $0x4] sm:$0xf] %vm346, %v315
  %349 = vst.msk [vmem:[%s4 + $0x8] sm:$0xf] %vm346, %v316
  %350 = vst.msk [vmem:[%s4 + $0xc] sm:$0xf] %vm346, %v317
  %351 = vst.msk [vmem:[%s4 + $0x10] sm:$0xf] %vm346, %v318
  %352 = vst.msk [vmem:[%s4 + $0x14] sm:$0xf] %vm346, %v319
  %353 = vst.msk [vmem:[%s4 + $0x18] sm:$0xf] %vm346, %v320
  %354 = vst.msk [vmem:[%s4 + $0x1c] sm:$0xf] %vm346, %v321
  %355 = vst.msk [vmem:[%s4 + $0x20] sm:$0xf] %vm346, %v322
  %356 = vst.msk [vmem:[%s4 + $0x24] sm:$0xf] %vm346, %v323
  %357 = vst.msk [vmem:[%s4 + $0x28] sm:$0xf] %vm346, %v324
  %358 = vst.msk [vmem:[%s4 + $0x2c] sm:$0xf] %vm346, %v325
  %359 = vst.msk [vmem:[%s4 + $0x30] sm:$0xf] %vm346, %v326
  %360 = vst.msk [vmem:[%s4 + $0x34] sm:$0xf] %vm346, %v327
  %361 = vst.msk [vmem:[%s4 + $0x38] sm:$0xf] %vm346, %v328
  %362 = vst.msk [vmem:[%s4 + $0x3c] sm:$0xf] %vm346, %v329
  %v363 = vld [vmem:[%s0 + $0x40] sm:$0xf]
  %v364 = vld [vmem:[%s0 + $0x44] sm:$0xf]
  %v365 = vld [vmem:[%s0 + $0x48] sm:$0xf]
  %v366 = vld [vmem:[%s0 + $0x4c] sm:$0xf]
  %v367 = vld [vmem:[%s0 + $0x50] sm:$0xf]
  %v368 = vld [vmem:[%s0 + $0x54] sm:$0xf]
  %v369 = vld [vmem:[%s0 + $0x58] sm:$0xf]
  %v370 = vld [vmem:[%s0 + $0x5c] sm:$0xf]
  %v371 = vld [vmem:[%s0 + $0x60] sm:$0xf]
  %v372 = vld [vmem:[%s0 + $0x64] sm:$0xf]
  %v373 = vld [vmem:[%s0 + $0x68] sm:$0xf]
  %v374 = vld [vmem:[%s0 + $0x6c] sm:$0xf]
  %v375 = vld [vmem:[%s0 + $0x70] sm:$0xf]
  %v376 = vld [vmem:[%s0 + $0x74] sm:$0xf]
  %v377 = vld [vmem:[%s0 + $0x78] sm:$0xf]
  %v378 = vld [vmem:[%s0 + $0x7c] sm:$0xf]
  %v379 = vld [vmem:[%s1] sm:$0xf]
  %v380 = vld [vmem:[%s1 + $0x4] sm:$0xf]
  %v381 = vld [vmem:[%s1 + $0x8] sm:$0xf]
  %v382 = vld [vmem:[%s1 + $0xc] sm:$0xf]
  %v383 = vld [vmem:[%s1 + $0x10] sm:$0xf]
  %v400 = vunpack.c.l.b16 %v363
  %v401 = vunpack.c.l.b16 %v364
  %v402 = vunpack.c.l.b16 %v365
  %v403 = vunpack.c.l.b16 %v366
  %v404 = vunpack.c.l.b16 %v367
  %v405 = vunpack.c.l.b16 %v368
  %v406 = vunpack.c.l.b16 %v369
  %v407 = vunpack.c.l.b16 %v370
  %v408 = vunpack.c.l.b16 %v371
  %v409 = vunpack.c.l.b16 %v372
  %v410 = vunpack.c.l.b16 %v373
  %v411 = vunpack.c.l.b16 %v374
  %v412 = vunpack.c.l.b16 %v375
  %v413 = vunpack.c.l.b16 %v376
  %v414 = vunpack.c.l.b16 %v377
  %v415 = vunpack.c.l.b16 %v378
  %v416 = vpack.c.b16 %v401, %v400
  %v417 = vpack.c.b16 %v403, %v402
  %v418 = vpack.c.b16 %v405, %v404
  %v419 = vpack.c.b16 %v407, %v406
  %v420 = vpack.c.b16 %v409, %v408
  %v421 = vpack.c.b16 %v411, %v410
  %v422 = vpack.c.b16 %v413, %v412
  %v423 = vpack.c.b16 %v415, %v414
  %v429 = vunpack.c.l.b16 %v379
  %v430 = vunpack.c.l.b16 %v380
  %v431 = vunpack.c.l.b16 %v381
  %v432 = vunpack.c.l.b16 %v382
  %v433 = vunpack.c.l.b16 %v383
  %v434 = vpack.c.b16 %v430, %v429
  %v435 = vpack.c.b16 %v432, %v431
  %v436 = vpack.c.b16 %v433, %v433
  %v440 = vsel %vm96, %v416, 0
  %v443 = vsel %vm96, %v417, 0
  %v446 = vsel %vm96, %v418, 0
  %v449 = vsel %vm96, %v419, 0
  %v452 = vsel %vm96, %v420, 0
  %v455 = vsel %vm96, %v421, 0
  %v458 = vsel %vm96, %v422, 0
  %v461 = vsel %vm96, %v423, 0
  %v464 = vsel %vm121, %v436, 0
  %466 = vmatprep.subr.bf16.mxu0 0
  %467 = vmatpush1.bf16.msra.mxu0 %v434
  %468 = vmatprep.subr.bf16.mxu0 0
  %469 = vmatpush1.bf16.msra.mxu0 %v435
  %470 = vmatprep.subr.bf16.mxu0 0
  %471 = vmatpush1.bf16.msra.mxu0 %v464
  %472 = vmatprep.subr.bf16.mxu0 0
  %473 = vmatpush1.bf16.msra.mxu0 0
  %474 = vmatprep.subr.bf16.mxu0 0
  %475 = vmatpush1.bf16.msra.mxu0 0
  %476 = vmatprep.subr.bf16.mxu0 0
  %477 = vmatpush1.bf16.msra.mxu0 0
  %478 = vmatprep.subr.bf16.mxu0 0
  %479 = vmatpush1.bf16.msra.mxu0 0
  %480 = vmatprep.subr.bf16.mxu0 0
  %481 = vmatpush1.bf16.msra.mxu0 0
  %482 = vmatprep.subr.bf16.mxu0 0
  %483 = vmatpush1.bf16.msra.mxu0 0
  %484 = vmatprep.subr.bf16.mxu0 0
  %485 = vmatpush1.bf16.msra.mxu0 0
  %486 = vmatprep.subr.bf16.mxu0 0
  %487 = vmatpush1.bf16.msra.mxu0 0
  %488 = vmatprep.subr.bf16.mxu0 0
  %489 = vmatpush1.bf16.msra.mxu0 0
  %490 = vmatprep.subr.bf16.mxu0 0
  %491 = vmatpush1.bf16.msra.mxu0 0
  %492 = vmatprep.subr.bf16.mxu0 0
  %493 = vmatpush1.bf16.msra.mxu0 0
  %494 = vmatprep.subr.bf16.mxu0 0
  %495 = vmatpush1.bf16.msra.mxu0 0
  %496 = vmatprep.subr.bf16.mxu0 0
  %497 = vmatpush1.bf16.msra.mxu0 0
  %498 = vmatprep.mubr.bf16.mxu0 0
  %499 = vmatmul.mubr.bf16.gmra.mrb[0].mxu0 %v440
  %v500 = vpop.f32.mrb[0].mxu0
  %v501 = vadd.f32 0.0, %v500
  %v502 = vpop.f32.mrb[0].mxu0
  %v503 = vpop.f32.mrb[0].mxu0
  %v504 = vadd.f32 0.0, %v503
  %v505 = vpop.f32.mrb[0].mxu0
  %506 = vmatprep.mubr.bf16.mxu0 0
  %507 = vmatmul.mubr.bf16.gmra.mrb[0].mxu0 %v443
  %v508 = vpop.f32.mrb[0].mxu0
  %v509 = vadd.f32 0.0, %v508
  %v510 = vpop.f32.mrb[0].mxu0
  %v511 = vpop.f32.mrb[0].mxu0
  %v512 = vadd.f32 0.0, %v511
  %v513 = vpop.f32.mrb[0].mxu0
  %514 = vmatprep.mubr.bf16.mxu0 0
  %515 = vmatmul.mubr.bf16.gmra.mrb[0].mxu0 %v446
  %v516 = vpop.f32.mrb[0].mxu0
  %v517 = vadd.f32 0.0, %v516
  %v518 = vpop.f32.mrb[0].mxu0
  %v519 = vpop.f32.mrb[0].mxu0
  %v520 = vadd.f32 0.0, %v519
  %v521 = vpop.f32.mrb[0].mxu0
  %522 = vmatprep.mubr.bf16.mxu0 0
  %523 = vmatmul.mubr.bf16.gmra.mrb[0].mxu0 %v449
  %v524 = vpop.f32.mrb[0].mxu0
  %v525 = vadd.f32 0.0, %v524
  %v526 = vpop.f32.mrb[0].mxu0
  %v527 = vpop.f32.mrb[0].mxu0
  %v528 = vadd.f32 0.0, %v527
  %v529 = vpop.f32.mrb[0].mxu0
  %530 = vmatprep.mubr.bf16.mxu0 0
  %531 = vmatmul.mubr.bf16.gmra.mrb[0].mxu0 %v452
  %v532 = vpop.f32.mrb[0].mxu0
  %v533 = vadd.f32 0.0, %v532
  %v534 = vpop.f32.mrb[0].mxu0
  %v535 = vpop.f32.mrb[0].mxu0
  %v536 = vadd.f32 0.0, %v535
  %v537 = vpop.f32.mrb[0].mxu0
  %538 = vmatprep.mubr.bf16.mxu0 0
  %539 = vmatmul.mubr.bf16.gmra.mrb[0].mxu0 %v455
  %v540 = vpop.f32.mrb[0].mxu0
  %v541 = vadd.f32 0.0, %v540
  %v542 = vpop.f32.mrb[0].mxu0
  %v543 = vpop.f32.mrb[0].mxu0
  %v544 = vadd.f32 0.0, %v543
  %v545 = vpop.f32.mrb[0].mxu0
  %546 = vmatprep.mubr.bf16.mxu0 0
  %547 = vmatmul.mubr.bf16.gmra.mrb[0].mxu0 %v458
  %v548 = vpop.f32.mrb[0].mxu0
  %v549 = vadd.f32 0.0, %v548
  %v550 = vpop.f32.mrb[0].mxu0
  %v551 = vpop.f32.mrb[0].mxu0
  %v552 = vadd.f32 0.0, %v551
  %v553 = vpop.f32.mrb[0].mxu0
  %554 = vmatprep.mubr.bf16.mxu0 0
  %555 = vmatmul.mubr.bf16.gmra.mrb[0].mxu0 %v461
  %v556 = vpop.f32.mrb[0].mxu0
  %v557 = vadd.f32 0.0, %v556
  %v558 = vpop.f32.mrb[0].mxu0
  %v559 = vpop.f32.mrb[0].mxu0
  %v560 = vadd.f32 0.0, %v559
  %v561 = vpop.f32.mrb[0].mxu0
  %562 = vdwg.mxu0
  %v563 = vmul.f32 %v501, %v226
  %v564 = vmul.f32 %v504, %v226
  %v565 = vmul.f32 %v509, %v226
  %v566 = vmul.f32 %v512, %v226
  %v567 = vmul.f32 %v517, %v226
  %v568 = vmul.f32 %v520, %v226
  %v569 = vmul.f32 %v525, %v226
  %v570 = vmul.f32 %v528, %v226
  %v571 = vmul.f32 %v533, %v226
  %v572 = vmul.f32 %v536, %v226
  %v573 = vmul.f32 %v541, %v226
  %v574 = vmul.f32 %v544, %v226
  %v575 = vmul.f32 %v549, %v226
  %v576 = vmul.f32 %v552, %v226
  %v577 = vmul.f32 %v557, %v226
  %v578 = vmul.f32 %v560, %v226
  %v579 = vadd.f32 %v563, %v248
  %v580 = vadd.f32 %v564, %v248
  %v581 = vadd.f32 %v565, %v248
  %v582 = vadd.f32 %v566, %v248
  %v583 = vadd.f32 %v567, %v248
  %v584 = vadd.f32 %v568, %v248
  %v585 = vadd.f32 %v569, %v248
  %v586 = vadd.f32 %v570, %v248
  %v587 = vadd.f32 %v571, %v248
  %v588 = vadd.f32 %v572, %v248
  %v589 = vadd.f32 %v573, %v248
  %v590 = vadd.f32 %v574, %v248
  %v591 = vadd.f32 %v575, %v248
  %v592 = vadd.f32 %v576, %v248
  %v593 = vadd.f32 %v577, %v248
  %v594 = vadd.f32 %v578, %v248
  %v595 = vmax.f32 %v579, 0.0
  %v596 = vmax.f32 %v580, 0.0
  %v597 = vmax.f32 %v581, 0.0
  %v598 = vmax.f32 %v582, 0.0
  %v599 = vmax.f32 %v583, 0.0
  %v600 = vmax.f32 %v584, 0.0
  %v601 = vmax.f32 %v585, 0.0
  %v602 = vmax.f32 %v586, 0.0
  %v603 = vmax.f32 %v587, 0.0
  %v604 = vmax.f32 %v588, 0.0
  %v605 = vmax.f32 %v589, 0.0
  %v606 = vmax.f32 %v590, 0.0
  %v607 = vmax.f32 %v591, 0.0
  %v608 = vmax.f32 %v592, 0.0
  %v609 = vmax.f32 %v593, 0.0
  %v610 = vmax.f32 %v594, 0.0
  %v611 = vpack.c.bf16 %v596, %v595
  %v612 = vpack.c.bf16 %v598, %v597
  %v613 = vpack.c.bf16 %v600, %v599
  %v614 = vpack.c.bf16 %v602, %v601
  %v615 = vpack.c.bf16 %v604, %v603
  %v616 = vpack.c.bf16 %v606, %v605
  %v617 = vpack.c.bf16 %v608, %v607
  %v618 = vpack.c.bf16 %v610, %v609
  %v627 = vunpack.c.l.b16 %v611
  %v628 = vunpack.c.h.b16 %v611
  %v629 = vunpack.c.l.b16 %v612
  %v630 = vunpack.c.h.b16 %v612
  %v631 = vunpack.c.l.b16 %v613
  %v632 = vunpack.c.h.b16 %v613
  %v633 = vunpack.c.l.b16 %v614
  %v634 = vunpack.c.h.b16 %v614
  %v635 = vunpack.c.l.b16 %v615
  %v636 = vunpack.c.h.b16 %v615
  %v637 = vunpack.c.l.b16 %v616
  %v638 = vunpack.c.h.b16 %v616
  %v639 = vunpack.c.l.b16 %v617
  %v640 = vunpack.c.h.b16 %v617
  %v641 = vunpack.c.l.b16 %v618
  %v642 = vunpack.c.h.b16 %v618
  %v643 = vpack.c.b16 %v627, %v627
  %v644 = vpack.c.b16 %v628, %v628
  %v645 = vpack.c.b16 %v629, %v629
  %v646 = vpack.c.b16 %v630, %v630
  %v647 = vpack.c.b16 %v631, %v631
  %v648 = vpack.c.b16 %v632, %v632
  %v649 = vpack.c.b16 %v633, %v633
  %v650 = vpack.c.b16 %v634, %v634
  %v651 = vpack.c.b16 %v635, %v635
  %v652 = vpack.c.b16 %v636, %v636
  %v653 = vpack.c.b16 %v637, %v637
  %v654 = vpack.c.b16 %v638, %v638
  %v655 = vpack.c.b16 %v639, %v639
  %v656 = vpack.c.b16 %v640, %v640
  %v657 = vpack.c.b16 %v641, %v641
  %v658 = vpack.c.b16 %v642, %v642
  %675 = vst.msk [vmem:[%s4 + $0x40] sm:$0xf] %vm346, %v643
  %676 = vst.msk [vmem:[%s4 + $0x44] sm:$0xf] %vm346, %v644
  %677 = vst.msk [vmem:[%s4 + $0x48] sm:$0xf] %vm346, %v645
  %678 = vst.msk [vmem:[%s4 + $0x4c] sm:$0xf] %vm346, %v646
  %679 = vst.msk [vmem:[%s4 + $0x50] sm:$0xf] %vm346, %v647
  %680 = vst.msk [vmem:[%s4 + $0x54] sm:$0xf] %vm346, %v648
  %681 = vst.msk [vmem:[%s4 + $0x58] sm:$0xf] %vm346, %v649
  %682 = vst.msk [vmem:[%s4 + $0x5c] sm:$0xf] %vm346, %v650
  %683 = vst.msk [vmem:[%s4 + $0x60] sm:$0xf] %vm346, %v651
  %684 = vst.msk [vmem:[%s4 + $0x64] sm:$0xf] %vm346, %v652
  %685 = vst.msk [vmem:[%s4 + $0x68] sm:$0xf] %vm346, %v653
  %686 = vst.msk [vmem:[%s4 + $0x6c] sm:$0xf] %vm346, %v654
  %687 = vst.msk [vmem:[%s4 + $0x70] sm:$0xf] %vm346, %v655
  %688 = vst.msk [vmem:[%s4 + $0x74] sm:$0xf] %vm346, %v656
  %689 = vst.msk [vmem:[%s4 + $0x78] sm:$0xf] %vm346, %v657
  %690 = vst.msk [vmem:[%s4 + $0x7c] sm:$0xf] %vm346, %v658
  %v691 = vld [vmem:[%s0 + $0x80] sm:$0xf]
  %v692 = vld [vmem:[%s0 + $0x84] sm:$0xf]
  %v693 = vld [vmem:[%s0 + $0x88] sm:$0xf]
  %v694 = vld [vmem:[%s0 + $0x8c] sm:$0xf]
  %v695 = vld [vmem:[%s0 + $0x90] sm:$0xf]
  %v696 = vld [vmem:[%s0 + $0x94] sm:$0xf]
  %v697 = vld [vmem:[%s0 + $0x98] sm:$0xf]
  %v698 = vld [vmem:[%s0 + $0x9c] sm:$0xf]
  %v699 = vld [vmem:[%s0 + $0xa0] sm:$0xf]
  %v700 = vld [vmem:[%s0 + $0xa4] sm:$0xf]
  %v701 = vld [vmem:[%s0 + $0xa8] sm:$0xf]
  %v702 = vld [vmem:[%s0 + $0xac] sm:$0xf]
  %v703 = vld [vmem:[%s0 + $0xb0] sm:$0xf]
  %v704 = vld [vmem:[%s0 + $0xb4] sm:$0xf]
  %v705 = vld [vmem:[%s0 + $0xb8] sm:$0xf]
  %v706 = vld [vmem:[%s0 + $0xbc] sm:$0xf]
  %v707 = vld [vmem:[%s1] sm:$0xf]
  %v708 = vld [vmem:[%s1 + $0x4] sm:$0xf]
  %v709 = vld [vmem:[%s1 + $0x8] sm:$0xf]
  %v710 = vld [vmem:[%s1 + $0xc] sm:$0xf]
  %v711 = vld [vmem:[%s1 + $0x10] sm:$0xf]
  %v728 = vunpack.c.l.b16 %v691
  %v729 = vunpack.c.l.b16 %v692
  %v730 = vunpack.c.l.b16 %v693
  %v731 = vunpack.c.l.b16 %v694
  %v732 = vunpack.c.l.b16 %v695
  %v733 = vunpack.c.l.b16 %v696
  %v734 = vunpack.c.l.b16 %v697
  %v735 = vunpack.c.l.b16 %v698
  %v736 = vunpack.c.l.b16 %v699
  %v737 = vunpack.c.l.b16 %v700
  %v738 = vunpack.c.l.b16 %v701
  %v739 = vunpack.c.l.b16 %v702
  %v740 = vunpack.c.l.b16 %v703
  %v741 = vunpack.c.l.b16 %v704
  %v742 = vunpack.c.l.b16 %v705
  %v743 = vunpack.c.l.b16 %v706
  %v744 = vpack.c.b16 %v729, %v728
  %v745 = vpack.c.b16 %v731, %v730
  %v746 = vpack.c.b16 %v733, %v732
  %v747 = vpack.c.b16 %v735, %v734
  %v748 = vpack.c.b16 %v737, %v736
  %v749 = vpack.c.b16 %v739, %v738
  %v750 = vpack.c.b16 %v741, %v740
  %v751 = vpack.c.b16 %v743, %v742
  %v757 = vunpack.c.l.b16 %v707
  %v758 = vunpack.c.l.b16 %v708
  %v759 = vunpack.c.l.b16 %v709
  %v760 = vunpack.c.l.b16 %v710
  %v761 = vunpack.c.l.b16 %v711
  %v762 = vpack.c.b16 %v758, %v757
  %v763 = vpack.c.b16 %v760, %v759
  %v764 = vpack.c.b16 %v761, %v761
  %v768 = vsel %vm96, %v744, 0
  %v771 = vsel %vm96, %v745, 0
  %v774 = vsel %vm96, %v746, 0
  %v777 = vsel %vm96, %v747, 0
  %v780 = vsel %vm96, %v748, 0
  %v783 = vsel %vm96, %v749, 0
  %v786 = vsel %vm96, %v750, 0
  %v789 = vsel %vm96, %v751, 0
  %v792 = vsel %vm121, %v764, 0
  %794 = vmatprep.subr.bf16.mxu0 0
  %795 = vmatpush1.bf16.msra.mxu0 %v762
  %796 = vmatprep.subr.bf16.mxu0 0
  %797 = vmatpush1.bf16.msra.mxu0 %v763
  %798 = vmatprep.subr.bf16.mxu0 0
  %799 = vmatpush1.bf16.msra.mxu0 %v792
  %800 = vmatprep.subr.bf16.mxu0 0
  %801 = vmatpush1.bf16.msra.mxu0 0
  %802 = vmatprep.subr.bf16.mxu0 0
  %803 = vmatpush1.bf16.msra.mxu0 0
  %804 = vmatprep.subr.bf16.mxu0 0
  %805 = vmatpush1.bf16.msra.mxu0 0
  %806 = vmatprep.subr.bf16.mxu0 0
  %807 = vmatpush1.bf16.msra.mxu0 0
  %808 = vmatprep.subr.bf16.mxu0 0
  %809 = vmatpush1.bf16.msra.mxu0 0
  %810 = vmatprep.subr.bf16.mxu0 0
  %811 = vmatpush1.bf16.msra.mxu0 0
  %812 = vmatprep.subr.bf16.mxu0 0
  %813 = vmatpush1.bf16.msra.mxu0 0
  %814 = vmatprep.subr.bf16.mxu0 0
  %815 = vmatpush1.bf16.msra.mxu0 0
  %816 = vmatprep.subr.bf16.mxu0 0
  %817 = vmatpush1.bf16.msra.mxu0 0
  %818 = vmatprep.subr.bf16.mxu0 0
  %819 = vmatpush1.bf16.msra.mxu0 0
  %820 = vmatprep.subr.bf16.mxu0 0
  %821 = vmatpush1.bf16.msra.mxu0 0
  %822 = vmatprep.subr.bf16.mxu0 0
  %823 = vmatpush1.bf16.msra.mxu0 0
  %824 = vmatprep.subr.bf16.mxu0 0
  %825 = vmatpush1.bf16.msra.mxu0 0
  %826 = vmatprep.mubr.bf16.mxu0 0
  %827 = vmatmul.mubr.bf16.gmra.mrb[0].mxu0 %v768
  %v828 = vpop.f32.mrb[0].mxu0
  %v829 = vadd.f32 0.0, %v828
  %v830 = vpop.f32.mrb[0].mxu0
  %v831 = vpop.f32.mrb[0].mxu0
  %v832 = vadd.f32 0.0, %v831
  %v833 = vpop.f32.mrb[0].mxu0
  %834 = vmatprep.mubr.bf16.mxu0 0
  %835 = vmatmul.mubr.bf16.gmra.mrb[0].mxu0 %v771
  %v836 = vpop.f32.mrb[0].mxu0
  %v837 = vadd.f32 0.0, %v836
  %v838 = vpop.f32.mrb[0].mxu0
  %v839 = vpop.f32.mrb[0].mxu0
  %v840 = vadd.f32 0.0, %v839
  %v841 = vpop.f32.mrb[0].mxu0
  %842 = vmatprep.mubr.bf16.mxu0 0
  %843 = vmatmul.mubr.bf16.gmra.mrb[0].mxu0 %v774
  %v844 = vpop.f32.mrb[0].mxu0
  %v845 = vadd.f32 0.0, %v844
  %v846 = vpop.f32.mrb[0].mxu0
  %v847 = vpop.f32.mrb[0].mxu0
  %v848 = vadd.f32 0.0, %v847
  %v849 = vpop.f32.mrb[0].mxu0
  %850 = vmatprep.mubr.bf16.mxu0 0
  %851 = vmatmul.mubr.bf16.gmra.mrb[0].mxu0 %v777
  %v852 = vpop.f32.mrb[0].mxu0
  %v853 = vadd.f32 0.0, %v852
  %v854 = vpop.f32.mrb[0].mxu0
  %v855 = vpop.f32.mrb[0].mxu0
  %v856 = vadd.f32 0.0, %v855
  %v857 = vpop.f32.mrb[0].mxu0
  %858 = vmatprep.mubr.bf16.mxu0 0
  %859 = vmatmul.mubr.bf16.gmra.mrb[0].mxu0 %v780
  %v860 = vpop.f32.mrb[0].mxu0
  %v861 = vadd.f32 0.0, %v860
  %v862 = vpop.f32.mrb[0].mxu0
  %v863 = vpop.f32.mrb[0].mxu0
  %v864 = vadd.f32 0.0, %v863
  %v865 = vpop.f32.mrb[0].mxu0
  %866 = vmatprep.mubr.bf16.mxu0 0
  %867 = vmatmul.mubr.bf16.gmra.mrb[0].mxu0 %v783
  %v868 = vpop.f32.mrb[0].mxu0
  %v869 = vadd.f32 0.0, %v868
  %v870 = vpop.f32.mrb[0].mxu0
  %v871 = vpop.f32.mrb[0].mxu0
  %v872 = vadd.f32 0.0, %v871
  %v873 = vpop.f32.mrb[0].mxu0
  %874 = vmatprep.mubr.bf16.mxu0 0
  %875 = vmatmul.mubr.bf16.gmra.mrb[0].mxu0 %v786
  %v876 = vpop.f32.mrb[0].mxu0
  %v877 = vadd.f32 0.0, %v876
  %v878 = vpop.f32.mrb[0].mxu0
  %v879 = vpop.f32.mrb[0].mxu0
  %v880 = vadd.f32 0.0, %v879
  %v881 = vpop.f32.mrb[0].mxu0
  %882 = vmatprep.mubr.bf16.mxu0 0
  %883 = vmatmul.mubr.bf16.gmra.mrb[0].mxu0 %v789
  %v884 = vpop.f32.mrb[0].mxu0
  %v885 = vadd.f32 0.0, %v884
  %v886 = vpop.f32.mrb[0].mxu0
  %v887 = vpop.f32.mrb[0].mxu0
  %v888 = vadd.f32 0.0, %v887
  %v889 = vpop.f32.mrb[0].mxu0
  %890 = vdwg.mxu0
  %v891 = vmul.f32 %v829, %v226
  %v892 = vmul.f32 %v832, %v226
  %v893 = vmul.f32 %v837, %v226
  %v894 = vmul.f32 %v840, %v226
  %v895 = vmul.f32 %v845, %v226
  %v896 = vmul.f32 %v848, %v226
  %v897 = vmul.f32 %v853, %v226
  %v898 = vmul.f32 %v856, %v226
  %v899 = vmul.f32 %v861, %v226
  %v900 = vmul.f32 %v864, %v226
  %v901 = vmul.f32 %v869, %v226
  %v902 = vmul.f32 %v872, %v226
  %v903 = vmul.f32 %v877, %v226
  %v904 = vmul.f32 %v880, %v226
  %v905 = vmul.f32 %v885, %v226
  %v906 = vmul.f32 %v888, %v226
  %v907 = vadd.f32 %v891, %v248
  %v908 = vadd.f32 %v892, %v248
  %v909 = vadd.f32 %v893, %v248
  %v910 = vadd.f32 %v894, %v248
  %v911 = vadd.f32 %v895, %v248
  %v912 = vadd.f32 %v896, %v248
  %v913 = vadd.f32 %v897, %v248
  %v914 = vadd.f32 %v898, %v248
  %v915 = vadd.f32 %v899, %v248
  %v916 = vadd.f32 %v900, %v248
  %v917 = vadd.f32 %v901, %v248
  %v918 = vadd.f32 %v902, %v248
  %v919 = vadd.f32 %v903, %v248
  %v920 = vadd.f32 %v904, %v248
  %v921 = vadd.f32 %v905, %v248
  %v922 = vadd.f32 %v906, %v248
  %v923 = vmax.f32 %v907, 0.0
  %v924 = vmax.f32 %v908, 0.0
  %v925 = vmax.f32 %v909, 0.0
  %v926 = vmax.f32 %v910, 0.0
  %v927 = vmax.f32 %v911, 0.0
  %v928 = vmax.f32 %v912, 0.0
  %v929 = vmax.f32 %v913, 0.0
  %v930 = vmax.f32 %v914, 0.0
  %v931 = vmax.f32 %v915, 0.0
  %v932 = vmax.f32 %v916, 0.0
  %v933 = vmax.f32 %v917, 0.0
  %v934 = vmax.f32 %v918, 0.0
  %v935 = vmax.f32 %v919, 0.0
  %v936 = vmax.f32 %v920, 0.0
  %v937 = vmax.f32 %v921, 0.0
  %v938 = vmax.f32 %v922, 0.0
  %v939 = vpack.c.bf16 %v924, %v923
  %v940 = vpack.c.bf16 %v926, %v925
  %v941 = vpack.c.bf16 %v928, %v927
  %v942 = vpack.c.bf16 %v930, %v929
  %v943 = vpack.c.bf16 %v932, %v931
  %v944 = vpack.c.bf16 %v934, %v933
  %v945 = vpack.c.bf16 %v936, %v935
  %v946 = vpack.c.bf16 %v938, %v937
  %v955 = vunpack.c.l.b16 %v939
  %v956 = vunpack.c.h.b16 %v939
  %v957 = vunpack.c.l.b16 %v940
  %v958 = vunpack.c.h.b16 %v940
  %v959 = vunpack.c.l.b16 %v941
  %v960 = vunpack.c.h.b16 %v941
  %v961 = vunpack.c.l.b16 %v942
  %v962 = vunpack.c.h.b16 %v942
  %v963 = vunpack.c.l.b16 %v943
  %v964 = vunpack.c.h.b16 %v943
  %v965 = vunpack.c.l.b16 %v944
  %v966 = vunpack.c.h.b16 %v944
  %v967 = vunpack.c.l.b16 %v945
  %v968 = vunpack.c.h.b16 %v945
  %v969 = vunpack.c.l.b16 %v946
  %v970 = vunpack.c.h.b16 %v946
  %v971 = vpack.c.b16 %v955, %v955
  %v972 = vpack.c.b16 %v956, %v956
  %v973 = vpack.c.b16 %v957, %v957
  %v974 = vpack.c.b16 %v958, %v958
  %v975 = vpack.c.b16 %v959, %v959
  %v976 = vpack.c.b16 %v960, %v960
  %v977 = vpack.c.b16 %v961, %v961
  %v978 = vpack.c.b16 %v962, %v962
  %v979 = vpack.c.b16 %v963, %v963
  %v980 = vpack.c.b16 %v964, %v964
  %v981 = vpack.c.b16 %v965, %v965
  %v982 = vpack.c.b16 %v966, %v966
  %v983 = vpack.c.b16 %v967, %v967
  %v984 = vpack.c.b16 %v968, %v968
  %v985 = vpack.c.b16 %v969, %v969
  %v986 = vpack.c.b16 %v970, %v970
  %1003 = vst.msk [vmem:[%s4 + $0x80] sm:$0xf] %vm346, %v971
  %1004 = vst.msk [vmem:[%s4 + $0x84] sm:$0xf] %vm346, %v972
  %1005 = vst.msk [vmem:[%s4 + $0x88] sm:$0xf] %vm346, %v973
  %1006 = vst.msk [vmem:[%s4 + $0x8c] sm:$0xf] %vm346, %v974
  %1007 = vst.msk [vmem:[%s4 + $0x90] sm:$0xf] %vm346, %v975
  %1008 = vst.msk [vmem:[%s4 + $0x94] sm:$0xf] %vm346, %v976
  %1009 = vst.msk [vmem:[%s4 + $0x98] sm:$0xf] %vm346, %v977
  %1010 = vst.msk [vmem:[%s4 + $0x9c] sm:$0xf] %vm346, %v978
  %1011 = vst.msk [vmem:[%s4 + $0xa0] sm:$0xf] %vm346, %v979
  %1012 = vst.msk [vmem:[%s4 + $0xa4] sm:$0xf] %vm346, %v980
  %1013 = vst.msk [vmem:[%s4 + $0xa8] sm:$0xf] %vm346, %v981
  %1014 = vst.msk [vmem:[%s4 + $0xac] sm:$0xf] %vm346, %v982
  %1015 = vst.msk [vmem:[%s4 + $0xb0] sm:$0xf] %vm346, %v983
  %1016 = vst.msk [vmem:[%s4 + $0xb4] sm:$0xf] %vm346, %v984
  %1017 = vst.msk [vmem:[%s4 + $0xb8] sm:$0xf] %vm346, %v985
  %1018 = vst.msk [vmem:[%s4 + $0xbc] sm:$0xf] %vm346, %v986
  %v1019 = vld [vmem:[%s0 + $0xc0] sm:$0xf]
  %v1020 = vld [vmem:[%s0 + $0xc4] sm:$0xf]
  %v1021 = vld [vmem:[%s0 + $0xc8] sm:$0xf]
  %v1022 = vld [vmem:[%s0 + $0xcc] sm:$0xf]
  %v1023 = vld [vmem:[%s0 + $0xd0] sm:$0xf]
  %v1024 = vld [vmem:[%s0 + $0xd4] sm:$0xf]
  %v1025 = vld [vmem:[%s0 + $0xd8] sm:$0xf]
  %v1026 = vld [vmem:[%s0 + $0xdc] sm:$0xf]
  %v1027 = vld [vmem:[%s0 + $0xe0] sm:$0xf]
  %v1028 = vld [vmem:[%s0 + $0xe4] sm:$0xf]
  %v1029 = vld [vmem:[%s0 + $0xe8] sm:$0xf]
  %v1030 = vld [vmem:[%s0 + $0xec] sm:$0xf]
  %v1031 = vld [vmem:[%s0 + $0xf0] sm:$0xf]
  %v1032 = vld [vmem:[%s0 + $0xf4] sm:$0xf]
  %v1033 = vld [vmem:[%s0 + $0xf8] sm:$0xf]
  %v1034 = vld [vmem:[%s0 + $0xfc] sm:$0xf]
  %v1035 = vld [vmem:[%s1] sm:$0xf]
  %v1036 = vld [vmem:[%s1 + $0x4] sm:$0xf]
  %v1037 = vld [vmem:[%s1 + $0x8] sm:$0xf]
  %v1038 = vld [vmem:[%s1 + $0xc] sm:$0xf]
  %v1039 = vld [vmem:[%s1 + $0x10] sm:$0xf]
  %v1056 = vunpack.c.l.b16 %v1019
  %v1057 = vunpack.c.l.b16 %v1020
  %v1058 = vunpack.c.l.b16 %v1021
  %v1059 = vunpack.c.l.b16 %v1022
  %v1060 = vunpack.c.l.b16 %v1023
  %v1061 = vunpack.c.l.b16 %v1024
  %v1062 = vunpack.c.l.b16 %v1025
  %v1063 = vunpack.c.l.b16 %v1026
  %v1064 = vunpack.c.l.b16 %v1027
  %v1065 = vunpack.c.l.b16 %v1028
  %v1066 = vunpack.c.l.b16 %v1029
  %v1067 = vunpack.c.l.b16 %v1030
  %v1068 = vunpack.c.l.b16 %v1031
  %v1069 = vunpack.c.l.b16 %v1032
  %v1070 = vunpack.c.l.b16 %v1033
  %v1071 = vunpack.c.l.b16 %v1034
  %v1072 = vpack.c.b16 %v1057, %v1056
  %v1073 = vpack.c.b16 %v1059, %v1058
  %v1074 = vpack.c.b16 %v1061, %v1060
  %v1075 = vpack.c.b16 %v1063, %v1062
  %v1076 = vpack.c.b16 %v1065, %v1064
  %v1077 = vpack.c.b16 %v1067, %v1066
  %v1078 = vpack.c.b16 %v1069, %v1068
  %v1079 = vpack.c.b16 %v1071, %v1070
  %v1085 = vunpack.c.l.b16 %v1035
  %v1086 = vunpack.c.l.b16 %v1036
  %v1087 = vunpack.c.l.b16 %v1037
  %v1088 = vunpack.c.l.b16 %v1038
  %v1089 = vunpack.c.l.b16 %v1039
  %v1090 = vpack.c.b16 %v1086, %v1085
  %v1091 = vpack.c.b16 %v1088, %v1087
  %v1092 = vpack.c.b16 %v1089, %v1089
  %v1096 = vsel %vm96, %v1072, 0
  %v1099 = vsel %vm96, %v1073, 0
  %v1102 = vsel %vm96, %v1074, 0
  %v1105 = vsel %vm96, %v1075, 0
  %v1108 = vsel %vm96, %v1076, 0
  %v1111 = vsel %vm96, %v1077, 0
  %v1114 = vsel %vm96, %v1078, 0
  %v1117 = vsel %vm96, %v1079, 0
  %v1120 = vsel %vm121, %v1092, 0
  %1122 = vmatprep.subr.bf16.mxu0 0
  %1123 = vmatpush1.bf16.msra.mxu0 %v1090
  %1124 = vmatprep.subr.bf16.mxu0 0
  %1125 = vmatpush1.bf16.msra.mxu0 %v1091
  %1126 = vmatprep.subr.bf16.mxu0 0
  %1127 = vmatpush1.bf16.msra.mxu0 %v1120
  %1128 = vmatprep.subr.bf16.mxu0 0
  %1129 = vmatpush1.bf16.msra.mxu0 0
  %1130 = vmatprep.subr.bf16.mxu0 0
  %1131 = vmatpush1.bf16.msra.mxu0 0
  %1132 = vmatprep.subr.bf16.mxu0 0
  %1133 = vmatpush1.bf16.msra.mxu0 0
  %1134 = vmatprep.subr.bf16.mxu0 0
  %1135 = vmatpush1.bf16.msra.mxu0 0
  %1136 = vmatprep.subr.bf16.mxu0 0
  %1137 = vmatpush1.bf16.msra.mxu0 0
  %1138 = vmatprep.subr.bf16.mxu0 0
  %1139 = vmatpush1.bf16.msra.mxu0 0
  %1140 = vmatprep.subr.bf16.mxu0 0
  %1141 = vmatpush1.bf16.msra.mxu0 0
  %1142 = vmatprep.subr.bf16.mxu0 0
  %1143 = vmatpush1.bf16.msra.mxu0 0
  %1144 = vmatprep.subr.bf16.mxu0 0
  %1145 = vmatpush1.bf16.msra.mxu0 0
  %1146 = vmatprep.subr.bf16.mxu0 0
  %1147 = vmatpush1.bf16.msra.mxu0 0
  %1148 = vmatprep.subr.bf16.mxu0 0
  %1149 = vmatpush1.bf16.msra.mxu0 0
  %1150 = vmatprep.subr.bf16.mxu0 0
  %1151 = vmatpush1.bf16.msra.mxu0 0
  %1152 = vmatprep.subr.bf16.mxu0 0
  %1153 = vmatpush1.bf16.msra.mxu0 0
  %1154 = vmatprep.mubr.bf16.mxu0 0
  %1155 = vmatmul.mubr.bf16.gmra.mrb[0].mxu0 %v1096
  %v1156 = vpop.f32.mrb[0].mxu0
  %v1157 = vadd.f32 0.0, %v1156
  %v1158 = vpop.f32.mrb[0].mxu0
  %v1159 = vpop.f32.mrb[0].mxu0
  %v1160 = vadd.f32 0.0, %v1159
  %v1161 = vpop.f32.mrb[0].mxu0
  %1162 = vmatprep.mubr.bf16.mxu0 0
  %1163 = vmatmul.mubr.bf16.gmra.mrb[0].mxu0 %v1099
  %v1164 = vpop.f32.mrb[0].mxu0
  %v1165 = vadd.f32 0.0, %v1164
  %v1166 = vpop.f32.mrb[0].mxu0
  %v1167 = vpop.f32.mrb[0].mxu0
  %v1168 = vadd.f32 0.0, %v1167
  %v1169 = vpop.f32.mrb[0].mxu0
  %1170 = vmatprep.mubr.bf16.mxu0 0
  %1171 = vmatmul.mubr.bf16.gmra.mrb[0].mxu0 %v1102
  %v1172 = vpop.f32.mrb[0].mxu0
  %v1173 = vadd.f32 0.0, %v1172
  %v1174 = vpop.f32.mrb[0].mxu0
  %v1175 = vpop.f32.mrb[0].mxu0
  %v1176 = vadd.f32 0.0, %v1175
  %v1177 = vpop.f32.mrb[0].mxu0
  %1178 = vmatprep.mubr.bf16.mxu0 0
  %1179 = vmatmul.mubr.bf16.gmra.mrb[0].mxu0 %v1105
  %v1180 = vpop.f32.mrb[0].mxu0
  %v1181 = vadd.f32 0.0, %v1180
  %v1182 = vpop.f32.mrb[0].mxu0
  %v1183 = vpop.f32.mrb[0].mxu0
  %v1184 = vadd.f32 0.0, %v1183
  %v1185 = vpop.f32.mrb[0].mxu0
  %1186 = vmatprep.mubr.bf16.mxu0 0
  %1187 = vmatmul.mubr.bf16.gmra.mrb[0].mxu0 %v1108
  %v1188 = vpop.f32.mrb[0].mxu0
  %v1189 = vadd.f32 0.0, %v1188
  %v1190 = vpop.f32.mrb[0].mxu0
  %v1191 = vpop.f32.mrb[0].mxu0
  %v1192 = vadd.f32 0.0, %v1191
  %v1193 = vpop.f32.mrb[0].mxu0
  %1194 = vmatprep.mubr.bf16.mxu0 0
  %1195 = vmatmul.mubr.bf16.gmra.mrb[0].mxu0 %v1111
  %v1196 = vpop.f32.mrb[0].mxu0
  %v1197 = vadd.f32 0.0, %v1196
  %v1198 = vpop.f32.mrb[0].mxu0
  %v1199 = vpop.f32.mrb[0].mxu0
  %v1200 = vadd.f32 0.0, %v1199
  %v1201 = vpop.f32.mrb[0].mxu0
  %1202 = vmatprep.mubr.bf16.mxu0 0
  %1203 = vmatmul.mubr.bf16.gmra.mrb[0].mxu0 %v1114
  %v1204 = vpop.f32.mrb[0].mxu0
  %v1205 = vadd.f32 0.0, %v1204
  %v1206 = vpop.f32.mrb[0].mxu0
  %v1207 = vpop.f32.mrb[0].mxu0
  %v1208 = vadd.f32 0.0, %v1207
  %v1209 = vpop.f32.mrb[0].mxu0
  %1210 = vmatprep.mubr.bf16.mxu0 0
  %1211 = vmatmul.mubr.bf16.gmra.mrb[0].mxu0 %v1117
  %v1212 = vpop.f32.mrb[0].mxu0
  %v1213 = vadd.f32 0.0, %v1212
  %v1214 = vpop.f32.mrb[0].mxu0
  %v1215 = vpop.f32.mrb[0].mxu0
  %v1216 = vadd.f32 0.0, %v1215
  %v1217 = vpop.f32.mrb[0].mxu0
  %1218 = vdwg.mxu0
  %v1219 = vmul.f32 %v1157, %v226
  %v1220 = vmul.f32 %v1160, %v226
  %v1221 = vmul.f32 %v1165, %v226
  %v1222 = vmul.f32 %v1168, %v226
  %v1223 = vmul.f32 %v1173, %v226
  %v1224 = vmul.f32 %v1176, %v226
  %v1225 = vmul.f32 %v1181, %v226
  %v1226 = vmul.f32 %v1184, %v226
  %v1227 = vmul.f32 %v1189, %v226
  %v1228 = vmul.f32 %v1192, %v226
  %v1229 = vmul.f32 %v1197, %v226
  %v1230 = vmul.f32 %v1200, %v226
  %v1231 = vmul.f32 %v1205, %v226
  %v1232 = vmul.f32 %v1208, %v226
  %v1233 = vmul.f32 %v1213, %v226
  %v1234 = vmul.f32 %v1216, %v226
  %v1235 = vadd.f32 %v1219, %v248
  %v1236 = vadd.f32 %v1220, %v248
  %v1237 = vadd.f32 %v1221, %v248
  %v1238 = vadd.f32 %v1222, %v248
  %v1239 = vadd.f32 %v1223, %v248
  %v1240 = vadd.f32 %v1224, %v248
  %v1241 = vadd.f32 %v1225, %v248
  %v1242 = vadd.f32 %v1226, %v248
  %v1243 = vadd.f32 %v1227, %v248
  %v1244 = vadd.f32 %v1228, %v248
  %v1245 = vadd.f32 %v1229, %v248
  %v1246 = vadd.f32 %v1230, %v248
  %v1247 = vadd.f32 %v1231, %v248
  %v1248 = vadd.f32 %v1232, %v248
  %v1249 = vadd.f32 %v1233, %v248
  %v1250 = vadd.f32 %v1234, %v248
  %v1251 = vmax.f32 %v1235, 0.0
  %v1252 = vmax.f32 %v1236, 0.0
  %v1253 = vmax.f32 %v1237, 0.0
  %v1254 = vmax.f32 %v1238, 0.0
  %v1255 = vmax.f32 %v1239, 0.0
  %v1256 = vmax.f32 %v1240, 0.0
  %v1257 = vmax.f32 %v1241, 0.0
  %v1258 = vmax.f32 %v1242, 0.0
  %v1259 = vmax.f32 %v1243, 0.0
  %v1260 = vmax.f32 %v1244, 0.0
  %v1261 = vmax.f32 %v1245, 0.0
  %v1262 = vmax.f32 %v1246, 0.0
  %v1263 = vmax.f32 %v1247, 0.0
  %v1264 = vmax.f32 %v1248, 0.0
  %v1265 = vmax.f32 %v1249, 0.0
  %v1266 = vmax.f32 %v1250, 0.0
  %v1267 = vpack.c.bf16 %v1252, %v1251
  %v1268 = vpack.c.bf16 %v1254, %v1253
  %v1269 = vpack.c.bf16 %v1256, %v1255
  %v1270 = vpack.c.bf16 %v1258, %v1257
  %v1271 = vpack.c.bf16 %v1260, %v1259
  %v1272 = vpack.c.bf16 %v1262, %v1261
  %v1273 = vpack.c.bf16 %v1264, %v1263
  %v1274 = vpack.c.bf16 %v1266, %v1265
  %v1283 = vunpack.c.l.b16 %v1267
  %v1284 = vunpack.c.h.b16 %v1267
  %v1285 = vunpack.c.l.b16 %v1268
  %v1286 = vunpack.c.h.b16 %v1268
  %v1287 = vunpack.c.l.b16 %v1269
  %v1288 = vunpack.c.h.b16 %v1269
  %v1289 = vunpack.c.l.b16 %v1270
  %v1290 = vunpack.c.h.b16 %v1270
  %v1291 = vunpack.c.l.b16 %v1271
  %v1292 = vunpack.c.h.b16 %v1271
  %v1293 = vunpack.c.l.b16 %v1272
  %v1294 = vunpack.c.h.b16 %v1272
  %v1295 = vunpack.c.l.b16 %v1273
  %v1296 = vunpack.c.h.b16 %v1273
  %v1297 = vunpack.c.l.b16 %v1274
  %v1298 = vunpack.c.h.b16 %v1274
  %v1299 = vpack.c.b16 %v1283, %v1283
  %v1300 = vpack.c.b16 %v1284, %v1284
  %v1301 = vpack.c.b16 %v1285, %v1285
  %v1302 = vpack.c.b16 %v1286, %v1286
  %v1303 = vpack.c.b16 %v1287, %v1287
  %v1304 = vpack.c.b16 %v1288, %v1288
  %v1305 = vpack.c.b16 %v1289, %v1289
  %v1306 = vpack.c.b16 %v1290, %v1290
  %v1307 = vpack.c.b16 %v1291, %v1291
  %v1308 = vpack.c.b16 %v1292, %v1292
  %v1309 = vpack.c.b16 %v1293, %v1293
  %v1310 = vpack.c.b16 %v1294, %v1294
  %v1311 = vpack.c.b16 %v1295, %v1295
  %v1312 = vpack.c.b16 %v1296, %v1296
  %v1313 = vpack.c.b16 %v1297, %v1297
  %v1314 = vpack.c.b16 %v1298, %v1298
  %1331 = vst.msk [vmem:[%s4 + $0xc0] sm:$0xf] %vm346, %v1299
  %1332 = vst.msk [vmem:[%s4 + $0xc4] sm:$0xf] %vm346, %v1300
  %1333 = vst.msk [vmem:[%s4 + $0xc8] sm:$0xf] %vm346, %v1301
  %1334 = vst.msk [vmem:[%s4 + $0xcc] sm:$0xf] %vm346, %v1302
  %1335 = vst.msk [vmem:[%s4 + $0xd0] sm:$0xf] %vm346, %v1303
  %1336 = vst.msk [vmem:[%s4 + $0xd4] sm:$0xf] %vm346, %v1304
  %1337 = vst.msk [vmem:[%s4 + $0xd8] sm:$0xf] %vm346, %v1305
  %1338 = vst.msk [vmem:[%s4 + $0xdc] sm:$0xf] %vm346, %v1306
  %1339 = vst.msk [vmem:[%s4 + $0xe0] sm:$0xf] %vm346, %v1307
  %1340 = vst.msk [vmem:[%s4 + $0xe4] sm:$0xf] %vm346, %v1308
  %1341 = vst.msk [vmem:[%s4 + $0xe8] sm:$0xf] %vm346, %v1309
  %1342 = vst.msk [vmem:[%s4 + $0xec] sm:$0xf] %vm346, %v1310
  %1343 = vst.msk [vmem:[%s4 + $0xf0] sm:$0xf] %vm346, %v1311
  %1344 = vst.msk [vmem:[%s4 + $0xf4] sm:$0xf] %vm346, %v1312
  %1345 = vst.msk [vmem:[%s4 + $0xf8] sm:$0xf] %vm346, %v1313
  %1346 = vst.msk [vmem:[%s4 + $0xfc] sm:$0xf] %vm346, %v1314
  // Predicated region
  $region18: #{conv_block_forward.1} parent=0 // pred_check
    _
  $region19: #{conv_block_forward.1} parent=0 // pred_check_branch
    %1348 = sbr.rel (0) target = $region21
  $region20: #{conv_block_forward.1} parent=0 // pred_region
    _
  $region21: #{conv_block_forward.1} parent=0 // pred_fallthru
    _
  // Predicated region
  $region22: #{conv_block_forward.1} parent=0 // pred_check
    _
  $region23: #{conv_block_forward.1} parent=0 // pred_check_branch
    %1350 = sbr.rel (0) target = $region25
  $region24: #{conv_block_forward.1} parent=0 // pred_region
    _
  $region25: #{conv_block_forward.1} parent=0 // pred_fallthru
    _

</llo_original>
